<compile_context>
chip_gen: v6e
topology: v6e:2x2x1
jax: 0.10.0
libtpu: 0.0.40
codegen_flags: <defaults>
</compile_context>

<pallas_src>
import functools

import jax
import jax.numpy as jnp
import numpy as np
from jax.experimental import pallas as pl
from jax.experimental.pallas import tpu as pltpu


# ----------------------------- Pallas kernel ------------------------------ #

def _roi_upsample_kernel(centers_ref, feats_ref, out_ref, *, H, W):
    # centers_ref: [1, TM, 2]   feats_ref: [1, TM, C]   out_ref: [1, C, H*W]
    TM = centers_ref.shape[1]
    HW = out_ref.shape[2]

    centers = centers_ref[0]                       # [TM, 2] f32
    feats = feats_ref[0]                           # [TM, C] f32

    # Per-roi scalar math ([TM, 1]).  (For very large M this could be done
    # lane-major as [1, M]; for typical roi counts it is negligible.)
    x = centers[:, 0:1]
    y = centers[:, 1:2]
    fx = x.astype(jnp.int32)                       # trunc toward zero == torch .long()
    fy = y.astype(jnp.int32)
    xp = x - fx.astype(jnp.float32)                # p = rois_center - floor
    yp = y - fy.astype(jnp.float32)

    vx = xp * xp + (1.0 - xp) * (1.0 - xp)         # value_x
    vy = yp * yp + (1.0 - yp) * (1.0 - yp)         # value_y
    inv = 0.25 / (vx * vy)                         # [TM, 1]  (0.25 from R_p_g)

    # Out-of-bounds mask exactly as the module: (px < H) & (py < H) -- H twice.
    fx_ok = fx < H
    cx_ok = (fx + 1) < H
    fy_ok = fy < H
    cy_ok = (fy + 1) < H

    zero = jnp.zeros_like(inv)
    w11 = jnp.where(fx_ok & fy_ok, (1.0 - xp) * (1.0 - yp) * inv, zero)  # (fx, fy)
    w12 = jnp.where(fx_ok & cy_ok, (1.0 - xp) * yp * inv, zero)          # (fx, fy+1)
    w21 = jnp.where(cx_ok & fy_ok, xp * (1.0 - yp) * inv, zero)          # (fx+1, fy)
    w22 = jnp.where(cx_ok & cy_ok, xp * yp * inv, zero)                  # (fx+1, fy+1)

    # Single fused scatter matrix over the flattened H*W axis.
    base = fx * W + fy                                            # [TM, 1] int32
    iota_hw = jax.lax.broadcasted_iota(jnp.int32, (TM, HW), 1)    # [TM, HW]
    delta = iota_hw - base                                        # [TM, HW]

    # Sum form (not nested select) so coincident corner indices still add,
    # matching torch index_add_ semantics.  Negative / >=HW indices simply
    # never match an iota value and are dropped, exactly like before.
    scatter = (jnp.where(delta == 0, w11, 0.0)
               + jnp.where(delta == 1, w12, 0.0)
               + jnp.where(delta == W, w21, 0.0)
               + jnp.where(delta == W + 1, w22, 0.0))             # [TM, HW]

    # out[c, hw] = sum_m feats[m, c] * scatter[m, hw]  -- one MXU contraction,
    # lane-dense result (HW on lanes).
    contrib = jax.lax.dot_general(
        feats, scatter,
        dimension_numbers=(((0,), (0,)), ((), ())),
        preferred_element_type=jnp.float32,
    )                                                             # [C, HW]

    k = pl.program_id(1)                      # M-chunk axis ("arbitrary")

    @pl.when(k == 0)
    def _():
        out_ref[0] = contrib

    @pl.when(k != 0)
    def _():
        out_ref[0] = out_ref[0] + contrib


def roi_upsample_batch(feature_shape, rois_center, rois_feature, *, m_tile=512):
    """feature_shape=(C,H,W); rois_center [N,M,2] f32; rois_feature [N,M,C] f32
    -> [N, C, H, W] f32 (NCHW, like the PyTorch module)."""
    C, H, W = (int(s) for s in feature_shape)
    N, M, _ = rois_center.shape
    HW = H * W
    assert m_tile % 8 == 0

    rois_center = rois_center.astype(jnp.float32)
    rois_feature = rois_feature.astype(jnp.float32)

    if M <= m_tile:
        TM = M                       # single chunk; full-dim block is always legal
    else:
        TM = m_tile                  # multiple of 8 (sublane tiling rule)
        Mp = ((M + TM - 1) // TM) * TM
        if Mp != M:                  # zero-padded rois have zero features -> zero contribution
            rois_center = jnp.pad(rois_center, ((0, 0), (0, Mp - M), (0, 0)))
            rois_feature = jnp.pad(rois_feature, ((0, 0), (0, Mp - M), (0, 0)))
        M = Mp

    kernel = functools.partial(_roi_upsample_kernel, H=H, W=W)
    out_flat = pl.pallas_call(
        kernel,
        out_shape=jax.ShapeDtypeStruct((N, C, HW), jnp.float32),
        grid=(N, M // TM),
        in_specs=[
            pl.BlockSpec((1, TM, 2), lambda n, k: (n, k, 0)),
            pl.BlockSpec((1, TM, C), lambda n, k: (n, k, 0)),
        ],
        # Output block index constant across the M-chunk axis -> resident
        # accumulator in VMEM; lane-dense (HW) stores.
        out_specs=pl.BlockSpec((1, C, HW), lambda n, k: (n, 0, 0)),
        compiler_params=pltpu.CompilerParams(
            dimension_semantics=("parallel", "arbitrary")),
    )(rois_center, rois_feature)

    # hw = px*W + py, so [N, C, H*W] reshapes directly to NCHW (no transpose).
    return out_flat.reshape(N, C, H, W)


# --------------------------- forward() glue (JAX) -------------------------- #

def roi_upsample_forward(feature_shape, all_rois_center, rois_feature_usps):
    """Reproduces RoiUpsample.forward stacking/permuting glue in plain JAX,
    then runs the Pallas kernel for every batch element at once."""
    # all_rois_center: list(levels) of list(2: x/y) of arrays [N, A, B, 1]
    stacked = jnp.stack([jnp.stack(level) for level in all_rois_center])  # [L,2,N,A,B,1]
    N = stacked.shape[2]
    centers = jnp.transpose(stacked, (2, 0, 3, 4, 5, 1)).reshape(N, -1, 2)  # [N, M, 2]

    rfu = jnp.squeeze(jnp.stack(rois_feature_usps))        # [L, N*A*B, C]
    L, C = rfu.shape[0], rfu.shape[2]
    rfu = rfu.reshape(L, N, -1, C).transpose(1, 0, 2, 3).reshape(N, -1, C)  # [N, M, C]

    out = roi_upsample_batch(feature_shape, centers, rfu)
    return out, centers, rfu


# ------------------------------ numpy reference ---------------------------- #

def _roi_upsample_ref_single(feature_shape, centers, feats):
    C, H, W = feature_shape
    out = np.zeros((H * W, C), np.float32)
    for m in range(centers.shape[0]):
        x, y = float(centers[m, 0]), float(centers[m, 1])
        fx, fy = int(x), int(y)                       # trunc like .long()
        xp, yp = x - fx, y - fy
        vx = xp * xp + (1 - xp) * (1 - xp)
        vy = yp * yp + (1 - yp) * (1 - yp)
        inv = 0.25 / (vx * vy)
        for px, py, w in ((fx, fy, (1 - xp) * (1 - yp)),
                          (fx, fy + 1, (1 - xp) * yp),
                          (fx + 1, fy, xp * (1 - yp)),
                          (fx + 1, fy + 1, xp * yp)):
            if px < H and py < H:                     # same (upper-bound-only) mask
                out[px * W + py] += w * inv * feats[m]
    return out.reshape(H, W, C).transpose(2, 0, 1)


# ----------------------------------- main ---------------------------------- #

if __name__ == "__main__":
    key = jax.random.PRNGKey(0)
    N, L, A, B = 2, 2, 2, 2          # batch, pyramid levels, roi grid
    C, H, W = 8, 16, 16              # feature_shape
    M = L * A * B                    # rois per batch element
    feature_shape = (C, H, W)

    # Build nested-list inputs shaped like the PyTorch forward expects.
    all_rois_center = []
    for _ in range(L):
        key, kx, ky = jax.random.split(key, 3)
        xs = jax.random.uniform(kx, (N, A, B, 1), jnp.float32, 0.0, 15.4)
        ys = jax.random.uniform(ky, (N, A, B, 1), jnp.float32, 0.0, 15.4)
        all_rois_center.append([xs, ys])

    rois_feature_usps = []
    for _ in range(L):
        key, kf = jax.random.split(key)
        rois_feature_usps.append(
            jax.random.normal(kf, (1, N * A * B, C), jnp.float32))

    out, centers_nm2, feats_nmc = roi_upsample_forward(
        feature_shape, all_rois_center, rois_feature_usps)
    out = jax.block_until_ready(out)

    # Reference check against a direct numpy transcription of the torch math.
    centers_np = np.asarray(centers_nm2)
    feats_np = np.asarray(feats_nmc)
    ref = np.stack([
        _roi_upsample_ref_single(feature_shape, centers_np[i], feats_np[i])
        for i in range(N)
    ])
    np.testing.assert_allclose(np.asarray(out), ref, rtol=1e-5, atol=1e-5)
    assert out.shape == (N, C, H, W)

    print("KERNEL_OK")
</pallas_src>

<mosaic_0001>
module attributes {stable_mosaic.version = 11 : i64} {
  func.func @_roi_upsample_kernel(%arg0: i32, %arg1: i32, %arg2: memref<1x8x2xf32, #tpu.memory_space<vmem>>, %arg3: memref<1x8x8xf32, #tpu.memory_space<vmem>>, %arg4: memref<1x8x256xf32, #tpu.memory_space<vmem>>) attributes {dimension_semantics = [#tpu.dimension_semantics<parallel>, #tpu.dimension_semantics<arbitrary>], iteration_bounds = array<i64: 2, 1>, scalar_prefetch = 0 : i64, scratch_operands = 0 : i64, tpu.core_type = #tpu.core_type<tc>, window_params = [{transform_indices = @transform_0, window_bounds = array<i64: 1, 8, 2>}, {transform_indices = @transform_1, window_bounds = array<i64: 1, 8, 8>}, {transform_indices = @transform_2, window_bounds = array<i64: 1, 8, 256>}]} {
    %c0 = arith.constant 0 : index
    %c0_0 = arith.constant 0 : index
    %c0_1 = arith.constant 0 : index
    %0 = vector.load %arg2[%c0, %c0_0, %c0_1] : memref<1x8x2xf32, #tpu.memory_space<vmem>>, vector<1x8x2xf32>
    %1 = vector.shape_cast %0 : vector<1x8x2xf32> to vector<8x2xf32>
    %c0_2 = arith.constant 0 : index
    %c0_3 = arith.constant 0 : index
    %c0_4 = arith.constant 0 : index
    %2 = vector.load %arg3[%c0_2, %c0_3, %c0_4] : memref<1x8x8xf32, #tpu.memory_space<vmem>>, vector<1x8x8xf32>
    %3 = vector.shape_cast %2 : vector<1x8x8xf32> to vector<8x8xf32>
    %4 = vector.extract_strided_slice %1 {offsets = [0, 0], sizes = [8, 1], strides = [1, 1]} : vector<8x2xf32> to vector<8x1xf32>
    %5 = vector.extract_strided_slice %1 {offsets = [0, 1], sizes = [8, 1], strides = [1, 1]} : vector<8x2xf32> to vector<8x1xf32>
    %6 = arith.fptosi %4 : vector<8x1xf32> to vector<8x1xi32>
    %7 = arith.fptosi %5 : vector<8x1xf32> to vector<8x1xi32>
    %8 = arith.sitofp %6 : vector<8x1xi32> to vector<8x1xf32>
    %9 = arith.subf %4, %8 : vector<8x1xf32>
    %10 = arith.sitofp %7 : vector<8x1xi32> to vector<8x1xf32>
    %11 = arith.subf %5, %10 : vector<8x1xf32>
    %12 = arith.mulf %9, %9 : vector<8x1xf32>
    %cst = arith.constant 1.000000e+00 : f32
    %13 = vector.broadcast %cst : f32 to vector<8x1xf32>
    %14 = arith.subf %13, %9 : vector<8x1xf32>
    %cst_5 = arith.constant 1.000000e+00 : f32
    %15 = vector.broadcast %cst_5 : f32 to vector<8x1xf32>
    %16 = arith.subf %15, %9 : vector<8x1xf32>
    %17 = arith.mulf %14, %16 : vector<8x1xf32>
    %18 = arith.addf %12, %17 : vector<8x1xf32>
    %19 = arith.mulf %11, %11 : vector<8x1xf32>
    %cst_6 = arith.constant 1.000000e+00 : f32
    %20 = vector.broadcast %cst_6 : f32 to vector<8x1xf32>
    %21 = arith.subf %20, %11 : vector<8x1xf32>
    %cst_7 = arith.constant 1.000000e+00 : f32
    %22 = vector.broadcast %cst_7 : f32 to vector<8x1xf32>
    %23 = arith.subf %22, %11 : vector<8x1xf32>
    %24 = arith.mulf %21, %23 : vector<8x1xf32>
    %25 = arith.addf %19, %24 : vector<8x1xf32>
    %26 = arith.mulf %18, %25 : vector<8x1xf32>
    %cst_8 = arith.constant 2.500000e-01 : f32
    %27 = vector.broadcast %cst_8 : f32 to vector<8x1xf32>
    %28 = arith.divf %27, %26 : vector<8x1xf32>
    %c16_i32 = arith.constant 16 : i32
    %29 = vector.broadcast %c16_i32 : i32 to vector<8x1xi32>
    %30 = arith.cmpi slt, %6, %29 : vector<8x1xi32>
    %c1_i32 = arith.constant 1 : i32
    %31 = vector.broadcast %c1_i32 : i32 to vector<8x1xi32>
    %32 = arith.addi %6, %31 : vector<8x1xi32>
    %c16_i32_9 = arith.constant 16 : i32
    %33 = vector.broadcast %c16_i32_9 : i32 to vector<8x1xi32>
    %34 = arith.cmpi slt, %32, %33 : vector<8x1xi32>
    %c16_i32_10 = arith.constant 16 : i32
    %35 = vector.broadcast %c16_i32_10 : i32 to vector<8x1xi32>
    %36 = arith.cmpi slt, %7, %35 : vector<8x1xi32>
    %c1_i32_11 = arith.constant 1 : i32
    %37 = vector.broadcast %c1_i32_11 : i32 to vector<8x1xi32>
    %38 = arith.addi %7, %37 : vector<8x1xi32>
    %c16_i32_12 = arith.constant 16 : i32
    %39 = vector.broadcast %c16_i32_12 : i32 to vector<8x1xi32>
    %40 = arith.cmpi slt, %38, %39 : vector<8x1xi32>
    %cst_13 = arith.constant 0.000000e+00 : f32
    %41 = vector.broadcast %cst_13 : f32 to vector<8x1xf32>
    %42 = arith.andi %30, %36 : vector<8x1xi1>
    %cst_14 = arith.constant 1.000000e+00 : f32
    %43 = vector.broadcast %cst_14 : f32 to vector<8x1xf32>
    %44 = arith.subf %43, %9 : vector<8x1xf32>
    %cst_15 = arith.constant 1.000000e+00 : f32
    %45 = vector.broadcast %cst_15 : f32 to vector<8x1xf32>
    %46 = arith.subf %45, %11 : vector<8x1xf32>
    %47 = arith.mulf %44, %46 : vector<8x1xf32>
    %48 = arith.mulf %47, %28 : vector<8x1xf32>
    %49 = arith.select %42, %48, %41 : vector<8x1xi1>, vector<8x1xf32>
    %50 = arith.andi %30, %40 : vector<8x1xi1>
    %cst_16 = arith.constant 1.000000e+00 : f32
    %51 = vector.broadcast %cst_16 : f32 to vector<8x1xf32>
    %52 = arith.subf %51, %9 : vector<8x1xf32>
    %53 = arith.mulf %52, %11 : vector<8x1xf32>
    %54 = arith.mulf %53, %28 : vector<8x1xf32>
    %55 = arith.select %50, %54, %41 : vector<8x1xi1>, vector<8x1xf32>
    %56 = arith.andi %34, %36 : vector<8x1xi1>
    %cst_17 = arith.constant 1.000000e+00 : f32
    %57 = vector.broadcast %cst_17 : f32 to vector<8x1xf32>
    %58 = arith.subf %57, %11 : vector<8x1xf32>
    %59 = arith.mulf %9, %58 : vector<8x1xf32>
    %60 = arith.mulf %59, %28 : vector<8x1xf32>
    %61 = arith.select %56, %60, %41 : vector<8x1xi1>, vector<8x1xf32>
    %62 = arith.andi %34, %40 : vector<8x1xi1>
    %63 = arith.mulf %9, %11 : vector<8x1xf32>
    %64 = arith.mulf %63, %28 : vector<8x1xf32>
    %65 = arith.select %62, %64, %41 : vector<8x1xi1>, vector<8x1xf32>
    %c16_i32_18 = arith.constant 16 : i32
    %66 = vector.broadcast %c16_i32_18 : i32 to vector<8x1xi32>
    %67 = arith.muli %6, %66 : vector<8x1xi32>
    %68 = arith.addi %67, %7 : vector<8x1xi32>
    %69 = tpu.iota {dimensions = array<i32: 1>} : vector<8x256xi32>
    %70 = vector.broadcast %68 : vector<8x1xi32> to vector<8x256xi32>
    %71 = arith.subi %69, %70 : vector<8x256xi32>
    %c0_i32 = arith.constant 0 : i32
    %72 = vector.broadcast %c0_i32 : i32 to vector<8x256xi32>
    %73 = arith.cmpi eq, %71, %72 : vector<8x256xi32>
    %cst_19 = arith.constant 0.000000e+00 : f32
    %74 = vector.shape_cast %49 : vector<8x1xf32> to vector<8x1xf32>
    %75 = vector.broadcast %74 : vector<8x1xf32> to vector<8x256xf32>
    %76 = vector.broadcast %cst_19 : f32 to vector<8x256xf32>
    %77 = arith.select %73, %75, %76 : vector<8x256xi1>, vector<8x256xf32>
    %c1_i32_20 = arith.constant 1 : i32
    %78 = vector.broadcast %c1_i32_20 : i32 to vector<8x256xi32>
    %79 = arith.cmpi eq, %71, %78 : vector<8x256xi32>
    %cst_21 = arith.constant 0.000000e+00 : f32
    %80 = vector.shape_cast %55 : vector<8x1xf32> to vector<8x1xf32>
    %81 = vector.broadcast %80 : vector<8x1xf32> to vector<8x256xf32>
    %82 = vector.broadcast %cst_21 : f32 to vector<8x256xf32>
    %83 = arith.select %79, %81, %82 : vector<8x256xi1>, vector<8x256xf32>
    %84 = arith.addf %77, %83 : vector<8x256xf32>
    %c16_i32_22 = arith.constant 16 : i32
    %85 = vector.broadcast %c16_i32_22 : i32 to vector<8x256xi32>
    %86 = arith.cmpi eq, %71, %85 : vector<8x256xi32>
    %cst_23 = arith.constant 0.000000e+00 : f32
    %87 = vector.shape_cast %61 : vector<8x1xf32> to vector<8x1xf32>
    %88 = vector.broadcast %87 : vector<8x1xf32> to vector<8x256xf32>
    %89 = vector.broadcast %cst_23 : f32 to vector<8x256xf32>
    %90 = arith.select %86, %88, %89 : vector<8x256xi1>, vector<8x256xf32>
    %91 = arith.addf %84, %90 : vector<8x256xf32>
    %c17_i32 = arith.constant 17 : i32
    %92 = vector.broadcast %c17_i32 : i32 to vector<8x256xi32>
    %93 = arith.cmpi eq, %71, %92 : vector<8x256xi32>
    %cst_24 = arith.constant 0.000000e+00 : f32
    %94 = vector.shape_cast %65 : vector<8x1xf32> to vector<8x1xf32>
    %95 = vector.broadcast %94 : vector<8x1xf32> to vector<8x256xf32>
    %96 = vector.broadcast %cst_24 : f32 to vector<8x256xf32>
    %97 = arith.select %93, %95, %96 : vector<8x256xi1>, vector<8x256xf32>
    %98 = arith.addf %91, %97 : vector<8x256xf32>
    %cst_25 = arith.constant dense<0.000000e+00> : vector<8x256xf32>
    %99 = tpu.matmul %3, %98, %cst_25 {dimension_numbers = #tpu.dot_dimension_numbers<[0], [0], [1], [1], [0, 1, 1, 1], [], []>} : vector<8x8xf32>, vector<8x256xf32>, vector<8x256xf32> -> vector<8x256xf32>
    %c0_i32_26 = arith.constant 0 : i32
    %100 = arith.cmpi eq, %arg1, %c0_i32_26 : i32
    %101 = arith.extui %100 : i1 to i32
    %c0_i32_27 = arith.constant 0 : i32
    %102 = arith.cmpi ne, %101, %c0_i32_27 : i32
    scf.if %102 {
      %c0_30 = arith.constant 0 : index
      %c0_31 = arith.constant 0 : index
      %c0_32 = arith.constant 0 : index
      %106 = vector.load %arg4[%c0_30, %c0_31, %c0_32] : memref<1x8x256xf32, #tpu.memory_space<vmem>>, vector<1x8x256xf32>
      %107 = vector.shape_cast %106 : vector<1x8x256xf32> to vector<8x256xf32>
      %108 = vector.shape_cast %99 : vector<8x256xf32> to vector<1x8x256xf32>
      tpu.vector_store %arg4[%c0_30, %c0_31, %c0_32], %108 {strides = array<i32>} : memref<1x8x256xf32, #tpu.memory_space<vmem>>, vector<1x8x256xf32>,
    } else {
    }
    %c0_i32_28 = arith.constant 0 : i32
    %103 = arith.cmpi ne, %arg1, %c0_i32_28 : i32
    %104 = arith.extui %103 : i1 to i32
    %c0_i32_29 = arith.constant 0 : i32
    %105 = arith.cmpi ne, %104, %c0_i32_29 : i32
    scf.if %105 {
      %c0_30 = arith.constant 0 : index
      %c0_31 = arith.constant 0 : index
      %c0_32 = arith.constant 0 : index
      %106 = vector.load %arg4[%c0_30, %c0_31, %c0_32] : memref<1x8x256xf32, #tpu.memory_space<vmem>>, vector<1x8x256xf32>
      %107 = vector.shape_cast %106 : vector<1x8x256xf32> to vector<8x256xf32>
      %108 = arith.addf %107, %99 : vector<8x256xf32>
      %c0_33 = arith.constant 0 : index
      %c0_34 = arith.constant 0 : index
      %c0_35 = arith.constant 0 : index
      %109 = vector.load %arg4[%c0_33, %c0_34, %c0_35] : memref<1x8x256xf32, #tpu.memory_space<vmem>>, vector<1x8x256xf32>
      %110 = vector.shape_cast %109 : vector<1x8x256xf32> to vector<8x256xf32>
      %111 = vector.shape_cast %108 : vector<8x256xf32> to vector<1x8x256xf32>
      tpu.vector_store %arg4[%c0_33, %c0_34, %c0_35], %111 {strides = array<i32>} : memref<1x8x256xf32, #tpu.memory_space<vmem>>, vector<1x8x256xf32>,
    } else {
    }
    return
  }
  func.func @transform_0(%arg0: i32, %arg1: i32) -> (i32, i32, i32) {
    %c0_i32 = arith.constant 0 : i32
    %c0_i32_0 = arith.constant 0 : i32
    return %arg0, %arg1, %c0_i32 : i32, i32, i32
  }
  func.func @transform_1(%arg0: i32, %arg1: i32) -> (i32, i32, i32) {
    %c0_i32 = arith.constant 0 : i32
    %c0_i32_0 = arith.constant 0 : i32
    return %arg0, %arg1, %c0_i32 : i32, i32, i32
  }
  func.func @transform_2(%arg0: i32, %arg1: i32) -> (i32, i32, i32) {
    %c0_i32 = arith.constant 0 : i32
    %c0_i32_0 = arith.constant 0 : i32
    %c0_i32_1 = arith.constant 0 : i32
    return %arg0, %c0_i32, %c0_i32_0 : i32, i32, i32
  }
}

</mosaic_0001>

<llo_original>
// kernel: tpu_custom_call.1
$region0: #{tpu_custom_call.1}
  #allocation0 [shape = 'u32[]', space=smem, size = 0x4, offset = 0x4, fixed_abs, tag = 'smem constant byte address 0x4 - core index']
  #allocation1 [shape = 'u32[144,128]{1,0:T(1,128)}', space=vmem, size = 0x12000, scoped, tag = 'internal scratch']
  %s0 = inlined_call_operand.vmem [shape: f32[2,8,2], index: 0, kind: input, shape index: {}]
  %s1 = inlined_call_operand.vmem [shape: f32[2,8,8], index: 1, kind: input, shape index: {}]
  %s2 = inlined_call_operand.hbm [shape: f32[2,8,256], index: 2, kind: output, shape index: {}]
  %s3 = sld [smem:[#allocation0]]
  $region49: #{tpu_custom_call.1} parent=0
    _
  %s5 = ssub.s32 1, %s3
  %s6 = scalar_select 0, %s5, %s3
  $region1: #{tpu_custom_call.1} parent=0
    #allocation2 [shape = 'u8[16384]{0}', space=vmem, size = 0x4000, scoped, tag = 'output window, operand 0']
    #allocation3 [shape = 's32[2]{0}', space=sflag, size = 0x8, scoped, tag = 'scoped memory for tpu_custom_call.1']
    %7 = vsyncpa [#allocation3], 0
    %s8 = scalar_lea.sflag [#allocation3], 1
    %9 = vsyncpa %s8, 0
    loop: start=0, step=1, limit=4
    $region2: #{tpu_custom_call.1} parent=1 // loop_pre_header
      _
    $region3: #{tpu_custom_call.1} parent=1 // loop_header
      %s11 = sphi 0, %s15
      %p12 = scmp.ge.s32.totalorder %s11, 4
      %s18 = sphi 0, %s30
      %s19 = sphi 0, %s26
      %s20 = sphi 0, %s18
      %s21 = sphi 0, %s19
      %s22 = sphi 0, %s20
      %s23 = sphi 0, %s21
      %s35 = sphi 0, %s37
      %s38 = sphi 0, %s35
      %s39 = sphi 0, %s38
      %s55 = sphi 0, %s39
      %s63 = sphi 0, %s65
      %s66 = sphi 0, %s63
      %s67 = sphi 0, %s66
      %s83 = sphi 0, %s67
      %s89 = sphi 0, %s91
      %s92 = sphi 0, %s89
      %s93 = sphi 0, %s92
      %s109 = sphi 0, %s93
    $region4: #{tpu_custom_call.1} parent=1 // loop_header_branch
      %14 = sbr.rel (%p12) target = $region8
    $region5: #{tpu_custom_call.1} parent=1 // loop_body
      %s16 = ssub.s32 %s11, 1
      %s17 = ssub.s32 %s11, 2
      %s24 = sadd.s32 1, %s19
      %p25 = scmp.ge.s32.totalorder %s24, 1
      %s26 = scalar_select %p25, 0, %s24
      %s27 = sadd.s32 1, %s18
      %s28 = scalar_select %p25, %s27, %s18
      %p29 = scmp.ge.s32.totalorder %s28, 2
      %s30 = scalar_select %p29, 0, %s28
      %s31 = ssub.s32 %s18, %s30
      %s32 = ssub.s32 %s19, %s26
      %s33 = sor.u32 %s31, %s32
      %p34 = scmp.eq.s32.totalorder %s33, 0
      %s36 = sadd.s32 %s35, 1
      %s37 = scalar_select %p34, %s35, %s36
      %p40 = pneg %p34
      %p41 = scmp.eq.s32.totalorder %s11, 1
      %p42 = por %p40, %p41
      %p43 = scmp.ne.s32.totalorder %s35, %s38
      %p44 = scmp.eq.s32.totalorder %s11, 0
      %p45 = por %p43, %p44
      %p46 = scmp.ne.s32.totalorder %s35, %s38
      %p47 = scmp.eq.s32.totalorder %s16, 1
      %p48 = por %p46, %p47
      %p49 = scmp.ne.s32.totalorder %s38, %s39
      %p50 = scmp.eq.s32.totalorder %s16, 0
      %p51 = por %p49, %p50
      %p52 = scmp.ne.s32.totalorder %s38, %s39
      %p53 = scmp.eq.s32.totalorder %s17, 1
      %p54 = por %p52, %p53
      %p56 = scmp.ne.s32.totalorder %s39, %s55
      %p57 = scmp.eq.s32.totalorder %s17, 0
      %p58 = por %p56, %p57
      %s59 = ssub.s32 %s18, %s30
      %s60 = ssub.s32 %s19, %s26
      %s61 = sor.u32 %s59, %s60
      %p62 = scmp.eq.s32.totalorder %s61, 0
      %s64 = sadd.s32 %s63, 1
      %s65 = scalar_select %p62, %s63, %s64
      %p68 = pneg %p62
      %p69 = scmp.eq.s32.totalorder %s11, 1
      %p70 = por %p68, %p69
      %p71 = scmp.ne.s32.totalorder %s63, %s66
      %p72 = scmp.eq.s32.totalorder %s11, 0
      %p73 = por %p71, %p72
      %p74 = scmp.ne.s32.totalorder %s63, %s66
      %p75 = scmp.eq.s32.totalorder %s16, 1
      %p76 = por %p74, %p75
      %p77 = scmp.ne.s32.totalorder %s66, %s67
      %p78 = scmp.eq.s32.totalorder %s16, 0
      %p79 = por %p77, %p78
      %p80 = scmp.ne.s32.totalorder %s66, %s67
      %p81 = scmp.eq.s32.totalorder %s17, 1
      %p82 = por %p80, %p81
      %p84 = scmp.ne.s32.totalorder %s67, %s83
      %p85 = scmp.eq.s32.totalorder %s17, 0
      %p86 = por %p84, %p85
      %s87 = ssub.s32 %s18, %s30
      %p88 = scmp.eq.s32.totalorder %s87, 0
      %s90 = sadd.s32 %s89, 1
      %s91 = scalar_select %p88, %s89, %s90
      %p94 = pneg %p88
      %p95 = scmp.eq.s32.totalorder %s11, 1
      %p96 = por %p94, %p95
      %p97 = scmp.ne.s32.totalorder %s89, %s92
      %p98 = scmp.eq.s32.totalorder %s11, 0
      %p99 = por %p97, %p98
      %p100 = scmp.ne.s32.totalorder %s89, %s92
      %p101 = scmp.eq.s32.totalorder %s16, 1
      %p102 = por %p100, %p101
      %p103 = scmp.ne.s32.totalorder %s92, %s93
      %p104 = scmp.eq.s32.totalorder %s16, 0
      %p105 = por %p103, %p104
      %p106 = scmp.ne.s32.totalorder %s92, %s93
      %p107 = scmp.eq.s32.totalorder %s17, 1
      %p108 = por %p106, %p107
      %p110 = scmp.ne.s32.totalorder %s93, %s109
      %p111 = scmp.eq.s32.totalorder %s17, 0
      %p112 = por %p110, %p111
      %p113 = scmp.le.s32.totalorder 1, %s11
      %p114 = scmp.lt.s32.totalorder %s11, 3
      %p115 = pnand %p113, %p114
      %p116 = pneg %p115
      // Predicated region
      $region9: #{tpu_custom_call.1} parent=5 // pred_check
        _
      $region10: #{tpu_custom_call.1} parent=5 // pred_check_branch
        %118 = sbr.rel (%p115) target = $region12
      $region11: #{tpu_custom_call.1} parent=5 // pred_region
        %s119 = ssub.s32 %s11, 1
      $region12: #{tpu_custom_call.1} parent=5 // pred_fallthru
        _
      %p120 = scmp.lt.s32.totalorder %s11, 2
      // Predicated region
      $region13: #{tpu_custom_call.1} parent=5 // pred_check
        %p121 = pneg %p120
      $region14: #{tpu_custom_call.1} parent=5 // pred_check_branch
        %123 = sbr.rel (%p121) target = $region16
      $region15: #{tpu_custom_call.1} parent=5 // pred_region
        // Predicated region
        $region17: #{tpu_custom_call.1} parent=15 // pred_check
          %p124 = pneg %p45
        $region18: #{tpu_custom_call.1} parent=15 // pred_check_branch
          %126 = sbr.rel (%p124) target = $region20
        $region19: #{tpu_custom_call.1} parent=15 // pred_region
          %p127 = scmp.lt.s32.totalorder %s18, 1
          %s128 = scalar_select %p127, %s18, 1
          %p129 = scmp.lt.s32.totalorder %s19, 0
          %s130 = scalar_select %p129, %s19, 0
          %s131 = sadd.s32 %s130, %s128
          %s132 = smul.addr %s131, 8
          %s133 = scalar_lea.vmem %s0, %s132
        $region20: #{tpu_custom_call.1} parent=15 // pred_fallthru
          _
        // Predicated region
        $region21: #{tpu_custom_call.1} parent=15 // pred_check
          %p134 = pneg %p73
        $region22: #{tpu_custom_call.1} parent=15 // pred_check_branch
          %136 = sbr.rel (%p134) target = $region24
        $region23: #{tpu_custom_call.1} parent=15 // pred_region
          %p137 = scmp.lt.s32.totalorder %s18, 1
          %s138 = scalar_select %p137, %s18, 1
          %p139 = scmp.lt.s32.totalorder %s19, 0
          %s140 = scalar_select %p139, %s19, 0
          %s141 = sadd.s32 %s140, %s138
          %s142 = smul.addr %s141, 8
          %s143 = scalar_lea.vmem %s1, %s142
        $region24: #{tpu_custom_call.1} parent=15 // pred_fallthru
          _
      $region16: #{tpu_custom_call.1} parent=5 // pred_fallthru
        _
      %p144 = scmp.le.s32.totalorder 1, %s11
      %p145 = scmp.lt.s32.totalorder %s11, 3
      %p146 = pnand %p144, %p145
      %p147 = pneg %p146
      // Predicated region
      $region25: #{tpu_custom_call.1} parent=5 // pred_check
        _
      $region26: #{tpu_custom_call.1} parent=5 // pred_check_branch
        %149 = sbr.rel (%p146) target = $region28
      $region27: #{tpu_custom_call.1} parent=5 // pred_region
        %s150 = ssub.s32 %s11, 1
        %p151 = scmp.lt.s32.totalorder %s20, 1
        %s152 = scalar_select %p151, %s20, 1
        %p153 = scmp.lt.s32.totalorder %s21, 0
        %s154 = scalar_select %p153, %s21, 0
        %s155 = sadd.s32 %s154, %s152
        %s156 = smul.addr %s155, 8
        %s157 = scalar_lea.vmem %s0, %s156
        %p158 = pneg %p51
        %p159 = pneg %p48
        %p160 = scmp.lt.s32.totalorder %s20, 1
        %s161 = scalar_select %p160, %s20, 1
        %p162 = scmp.lt.s32.totalorder %s21, 0
        %s163 = scalar_select %p162, %s21, 0
        %s164 = sadd.s32 %s163, %s161
        %s165 = smul.addr %s164, 8
        %s166 = scalar_lea.vmem %s1, %s165
        %p167 = pneg %p79
        %p168 = pneg %p76
        %p169 = pneg %p105
        %p170 = pneg %p102
        %s171 = sand.u32 %s92, 1
        %s172 = scalar_lea.sflag [#allocation3], %s171
        %s173 = sand.u32 %s92, 1
        %s174 = smul.addr %s173, 16
        %s175 = scalar_lea.vmem [#allocation2], %s174
        %p176 = scmp.lt.s32.totalorder %s20, 1
        %s177 = scalar_select %p176, %s20, 1
        %p178 = scmp.lt.s32.totalorder %s21, 0
        %s179 = scalar_select %p178, %s21, 0
        %s180 = sadd.s32 %s179, %s177
        %s181 = smul.addr %s180, 8
        %s182 = scalar_lea.vmem %s0, %s181
        %p183 = scmp.lt.s32.totalorder %s20, 1
        %s184 = scalar_select %p183, %s20, 1
        %p185 = scmp.lt.s32.totalorder %s21, 0
        %s186 = scalar_select %p185, %s21, 0
        %s187 = sadd.s32 %s186, %s184
        %s188 = smul.addr %s187, 8
        %s189 = scalar_lea.vmem %s1, %s188
        %v190 = vld [vmem:[%s182] sm:$0xff]
        %v191 = vld [vmem:[%s189] sm:$0xff]
        %v192 = vcvt.f32.s32.to.zero.pseudo %v190
        %v193 = vcvt.s32.f32 %v192
        %v194 = vsub.f32 %v190, %v193
        %v195 = vmul.f32 %v194, %v194
        %v196 = vsub.f32 1.0, %v194
        %v197 = vmul.f32 %v196, %v196
        %v198 = vadd.f32 %v195, %v197
        %200 = vrot.lane.b32.xlu0 %v198, 127
        %v201 = vpop.permute.xlu0 %200
        %v203 = vmul.f32 %v198, %v201
        %v204 = vrcp.pop %v203
        %v205 = vmul.f32 0.25, %v204
        %vm206 = vcmp.lt.s32.totalorder %v192, 16
        %v207 = vadd.s32 %v192, 1
        %vm208 = vcmp.lt.s32.totalorder %v207, 16
        %v209 = vsel %vm206, 1, 0
        %210 = vrot.lane.b32.xlu0 %v209, 127
        %v211 = vpop.permute.xlu0 %210
        %vm212 = vcmp.ne.s32.totalorder %v211, 0
        %vm213 = vmand %vm206, %vm212
        %215 = vrot.lane.b32.xlu0 %v196, 127
        %v216 = vpop.permute.xlu0 %215
        %v218 = vmul.f32 %v196, %v216
        %v219 = vmul.f32 %v218, %v205
        %v220 = vsel %vm213, %v219, 0.0
        %v221 = vsel %vm208, 1, 0
        %222 = vrot.lane.b32.xlu0 %v221, 127
        %v223 = vpop.permute.xlu0 %222
        %vm224 = vcmp.ne.s32.totalorder %v223, 0
        %vm225 = vmand %vm206, %vm224
        %227 = vrot.lane.b32.xlu0 %v194, 127
        %v228 = vpop.permute.xlu0 %227
        %v230 = vmul.f32 %v196, %v228
        %v231 = vmul.f32 %v230, %v205
        %v232 = vsel %vm225, %v231, 0.0
        %vm233 = vmand %vm208, %vm212
        %v234 = vmul.f32 %v194, %v216
        %v235 = vmul.f32 %v234, %v205
        %v236 = vsel %vm233, %v235, 0.0
        %vm237 = vmand %vm208, %vm224
        %v238 = vmul.f32 %v194, %v228
        %v239 = vmul.f32 %v238, %v205
        %v240 = vsel %vm237, %v239, 0.0
        %v241 = vmul.u32 %v192, 16
        %242 = vrot.lane.b32.xlu0 %v192, 127
        %v243 = vpop.permute.xlu0 %242
        %v244 = vadd.s32 %v241, %v243
        %v245 = vlaneseq
        %v246 = vand.u32 %v245, 127
        %v247 = vadd.s32 %v246, 128
        %248 = vset.pattern.permute.xlu0 0
        %249 = vperm.xlu0 %248, %v244
        %v250 = vpop.permute.xlu0 %249
        %v251 = vsub.s32 %v246, %v250
        %v252 = vsub.s32 %v247, %v250
        %vm253 = vcmp.eq.s32.totalorder %v251, 0
        %vm254 = vcmp.eq.s32.totalorder %v252, 0
        %256 = vset.pattern.permute.xlu0 0
        %257 = vperm.xlu0 %256, %v220
        %v258 = vpop.permute.xlu0 %257
        %v260 = vsel %vm253, %v258, 0.0
        %v261 = vsel %vm254, %v258, 0.0
        %vm262 = vcmp.eq.s32.totalorder %v251, 1
        %vm263 = vcmp.eq.s32.totalorder %v252, 1
        %265 = vset.pattern.permute.xlu0 0
        %266 = vperm.xlu0 %265, %v232
        %v267 = vpop.permute.xlu0 %266
        %v269 = vsel %vm262, %v267, 0.0
        %v270 = vsel %vm263, %v267, 0.0
        %v271 = vadd.f32 %v260, %v269
        %v272 = vadd.f32 %v261, %v270
        %vm273 = vcmp.eq.s32.totalorder %v251, 16
        %vm274 = vcmp.eq.s32.totalorder %v252, 16
        %276 = vset.pattern.permute.xlu0 0
        %277 = vperm.xlu0 %276, %v236
        %v278 = vpop.permute.xlu0 %277
        %v280 = vsel %vm273, %v278, 0.0
        %v281 = vsel %vm274, %v278, 0.0
        %v282 = vadd.f32 %v271, %v280
        %v283 = vadd.f32 %v272, %v281
        %vm284 = vcmp.eq.s32.totalorder %v251, 17
        %vm285 = vcmp.eq.s32.totalorder %v252, 17
        %287 = vset.pattern.permute.xlu0 0
        %288 = vperm.xlu0 %287, %v240
        %v289 = vpop.permute.xlu0 %288
        %v291 = vsel %vm284, %v289, 0.0
        %v292 = vsel %vm285, %v289, 0.0
        %v293 = vadd.f32 %v282, %v291
        %v294 = vadd.f32 %v283, %v292
        %295 = vxpose.xlu0.b32.start [1/16] %v191, 128
        %296 = vxpose.xlu0.b32.cont [2/16] 0.0, 128
        %297 = vxpose.xlu0.b32.cont [3/16] 0.0, 128
        %298 = vxpose.xlu0.b32.cont [4/16] 0.0, 128
        %299 = vxpose.xlu0.b32.cont [5/16] 0.0, 128
        %300 = vxpose.xlu0.b32.cont [6/16] 0.0, 128
        %301 = vxpose.xlu0.b32.cont [7/16] 0.0, 128
        %302 = vxpose.xlu0.b32.cont [8/16] 0.0, 128
        %303 = vxpose.xlu0.b32.cont [9/16] 0.0, 128
        %304 = vxpose.xlu0.b32.cont [10/16] 0.0, 128
        %305 = vxpose.xlu0.b32.cont [11/16] 0.0, 128
        %306 = vxpose.xlu0.b32.cont [12/16] 0.0, 128
        %307 = vxpose.xlu0.b32.cont [13/16] 0.0, 128
        %308 = vxpose.xlu0.b32.cont [14/16] 0.0, 128
        %309 = vxpose.xlu0.b32.cont [15/16] 0.0, 128
        %310 = vxpose.xlu0.b32.end [16/16] 0.0, 128
        %v311 = vpop.trf.xlu0
        %v312 = vpop.trf.xlu0
        %v313 = vpop.trf.xlu0
        %v314 = vpop.trf.xlu0
        %v315 = vpop.trf.xlu0
        %v316 = vpop.trf.xlu0
        %v317 = vpop.trf.xlu0
        %v318 = vpop.trf.xlu0
        %v319 = vpop.trf.xlu0
        %v320 = vpop.trf.xlu0
        %v321 = vpop.trf.xlu0
        %v322 = vpop.trf.xlu0
        %v323 = vpop.trf.xlu0
        %v324 = vpop.trf.xlu0
        %v325 = vpop.trf.xlu0
        %v326 = vpop.trf.xlu0
        %vm327 = vcmask 64512
        %v329 = vsel %vm327, %v311, 0
        %331 = vmatprep.subr.mxu0 0.0
        %332 = vmatpush1.msra.mxu0 0.0
        %333 = vmatprep.subr.mxu0 0.0
        %334 = vmatpush1.msra.mxu0 0.0
        %335 = vmatprep.subr.mxu0 0.0
        %336 = vmatpush1.msra.mxu0 0.0
        %337 = vmatprep.subr.mxu0 0.0
        %338 = vmatpush1.msra.mxu0 0.0
        %339 = vmatprep.subr.mxu0 0.0
        %340 = vmatpush1.msra.mxu0 0.0
        %341 = vmatprep.subr.mxu0 0.0
        %342 = vmatpush1.msra.mxu0 0.0
        %343 = vmatprep.subr.mxu0 0.0
        %344 = vmatpush1.msra.mxu0 0.0
        %345 = vmatprep.subr.mxu0 0.0
        %346 = vmatpush1.msra.mxu0 0.0
        %347 = vmatprep.subr.mxu0 0.0
        %348 = vmatpush1.msra.mxu0 0.0
        %349 = vmatprep.subr.mxu0 0.0
        %350 = vmatpush1.msra.mxu0 0.0
        %351 = vmatprep.subr.mxu0 0.0
        %352 = vmatpush1.msra.mxu0 0.0
        %353 = vmatprep.subr.mxu0 0.0
        %354 = vmatpush1.msra.mxu0 0.0
        %355 = vmatprep.subr.mxu0 0.0
        %356 = vmatpush1.msra.mxu0 0.0
        %357 = vmatprep.subr.mxu0 0.0
        %358 = vmatpush1.msra.mxu0 0.0
        %359 = vmatprep.subr.mxu0 0.0
        %360 = vmatpush1.msra.mxu0 0.0
        %361 = vmatprep.subr.mxu0 %v294
        %362 = vmatpush1.msra.mxu0 %v293
        %363 = vmatprep.subr.mxu0 0.0
        %364 = vmatpush2.msra.mxu0 0.0
        %365 = vmatprep.subr.mxu0 0.0
        %366 = vmatpush2.msra.mxu0 0.0
        %367 = vmatprep.subr.mxu0 0.0
        %368 = vmatpush2.msra.mxu0 0.0
        %369 = vmatprep.subr.mxu0 0.0
        %370 = vmatpush2.msra.mxu0 0.0
        %371 = vmatprep.subr.mxu0 0.0
        %372 = vmatpush2.msra.mxu0 0.0
        %373 = vmatprep.subr.mxu0 0.0
        %374 = vmatpush2.msra.mxu0 0.0
        %375 = vmatprep.subr.mxu0 0.0
        %376 = vmatpush2.msra.mxu0 0.0
        %377 = vmatprep.subr.mxu0 0.0
        %378 = vmatpush2.msra.mxu0 0.0
        %379 = vmatprep.subr.mxu0 0.0
        %380 = vmatpush2.msra.mxu0 0.0
        %381 = vmatprep.subr.mxu0 0.0
        %382 = vmatpush2.msra.mxu0 0.0
        %383 = vmatprep.subr.mxu0 0.0
        %384 = vmatpush2.msra.mxu0 0.0
        %385 = vmatprep.subr.mxu0 0.0
        %386 = vmatpush2.msra.mxu0 0.0
        %387 = vmatprep.subr.mxu0 0.0
        %388 = vmatpush2.msra.mxu0 0.0
        %389 = vmatprep.subr.mxu0 0.0
        %390 = vmatpush2.msra.mxu0 0.0
        %391 = vmatprep.subr.mxu0 0.0
        %392 = vmatpush2.msra.mxu0 0.0
        %393 = vmatprep.subr.mxu0 0.0
        %394 = vmatpush2.msra.mxu0 0.0
        %395 = vmatprep.mubr.f32.mxu0 0.0
        %396 = vmatmul.mubr.f32.gmra.mxu0 %v329
        %v397 = vpop.f32.mrf.mxu0
        %v398 = vadd.f32 0.0, %v397
        %v399 = vpop.f32.mrf.mxu0
        %v400 = vadd.f32 0.0, %v399
        %401 = vdwg.mxu0
        %p402 = scmp.eq.s32.totalorder %s21, 0
        // Predicated region
        $region29: #{tpu_custom_call.1} parent=27 // pred_check
          %p403 = pneg %p402
        $region30: #{tpu_custom_call.1} parent=27 // pred_check_branch
          %405 = sbr.rel (%p403) target = $region32
        $region31: #{tpu_custom_call.1} parent=27 // pred_region
          %406 = vst [vmem:[%s175] sm:$0xff] %v398
          %407 = vst [vmem:[%s175 + $0x8] sm:$0xff] %v400
        $region32: #{tpu_custom_call.1} parent=27 // pred_fallthru
          _
        %p408 = scmp.ne.s32.totalorder %s21, 0
        // Predicated region
        $region33: #{tpu_custom_call.1} parent=27 // pred_check
          %p409 = pneg %p408
        $region34: #{tpu_custom_call.1} parent=27 // pred_check_branch
          %411 = sbr.rel (%p409) target = $region36
        $region35: #{tpu_custom_call.1} parent=27 // pred_region
          %v412 = vld [vmem:[%s175] sm:$0xff]
          %v413 = vld [vmem:[%s175 + $0x8] sm:$0xff]
          %v414 = vadd.f32 %v412, %v398
          %v415 = vadd.f32 %v413, %v400
          %416 = vst [vmem:[%s175] sm:$0xff] %v414
          %417 = vst [vmem:[%s175 + $0x8] sm:$0xff] %v415
        $region36: #{tpu_custom_call.1} parent=27 // pred_fallthru
          _
        %s418 = sand.u32 %s92, 1
        %s419 = scalar_lea.sflag [#allocation3], %s418
        %s420 = sand.u32 %s92, 1
        %s421 = smul.addr %s420, 16
        %s422 = scalar_lea.vmem [#allocation2], %s421
        // Predicated region
        $region37: #{tpu_custom_call.1} parent=27 // pred_check
          %p423 = pneg %p102
        $region38: #{tpu_custom_call.1} parent=27 // pred_check_branch
          %425 = sbr.rel (%p423) target = $region40
        $region39: #{tpu_custom_call.1} parent=27 // pred_region
          %s427 = ssub.s32 256, 256
          %428 = vsyncadd %s419, %s427
          %s429 = smul.addr %s20, 2
          %s430 = smul.addr %s429, 128
          %s431 = scalar_lea.hbm %s2, %s430
          %s433 = sshll.u32 %s422, 4
          %s434 = int_to_ptr.vmem [resolvable:$true] %s433
          %436 = dma.vmem_to_hbm [thread:$0]  %s434, 256, %s431, %s419
        $region40: #{tpu_custom_call.1} parent=27 // pred_fallthru
          _
      $region28: #{tpu_custom_call.1} parent=5 // pred_fallthru
        _
      %p437 = scmp.le.s32.totalorder 2, %s11
      // Predicated region
      $region41: #{tpu_custom_call.1} parent=5 // pred_check
        %p438 = pneg %p437
      $region42: #{tpu_custom_call.1} parent=5 // pred_check_branch
        %440 = sbr.rel (%p438) target = $region44
      $region43: #{tpu_custom_call.1} parent=5 // pred_region
        %s441 = ssub.s32 %s11, 2
        // Predicated region
        $region45: #{tpu_custom_call.1} parent=43 // pred_check
          %p442 = pneg %p108
        $region46: #{tpu_custom_call.1} parent=43 // pred_check_branch
          %444 = sbr.rel (%p442) target = $region48
        $region47: #{tpu_custom_call.1} parent=43 // pred_region
          %s445 = sand.u32 %s93, 1
          %s446 = scalar_lea.sflag [#allocation3], %s445
          %s447 = sand.u32 %s93, 1
          %s448 = smul.addr %s447, 16
          %s449 = scalar_lea.vmem [#allocation2], %s448
          %450 = dma.done %s446, 256
        $region48: #{tpu_custom_call.1} parent=43 // pred_fallthru
          _
      $region44: #{tpu_custom_call.1} parent=5 // pred_fallthru
        _
    $region6: #{tpu_custom_call.1} parent=1 // loop_footer
      %s15 = sadd.s32 1, %s11
    $region7: #{tpu_custom_call.1} parent=1 // loop_footer_branch
      %10 = sbr.rel target = $region3
    $region8: #{tpu_custom_call.1} parent=1 // loop_exit
      _
    %451 = vsyncpa [#allocation3], 1
    %s452 = scalar_lea.sflag [#allocation3], 1
    %453 = vsyncpa %s452, 1

</llo_original>
